<compile_context>
chip_gen: v5e
topology: v5e:2x2
jax: 0.10.0
libtpu: 0.0.40
codegen_flags: <defaults>
</compile_context>

<pallas_src>
import jax
import jax.numpy as jnp
from jax.experimental import pallas as pl
from jax.experimental.pallas import tpu as pltpu

LANE = 128      # lane width (last dim)
SUBLANE = 8     # sublane width (second-to-last dim)


def _round_up(x, m):
    return (x + m - 1) // m * m


# ---------------------------------------------------------------------------
# Kernel: whole MLP fused; one grid step = one batch tile of TB rows.
# Weights/biases are VMEM-resident across the whole grid (constant index_map).
# ---------------------------------------------------------------------------
def _qnet_kernel(x_ref,
                 w1_ref, b1_ref,
                 w2_ref, b2_ref,
                 w3_ref, b3_ref,
                 w4_ref, b4_ref,
                 o_ref):
    x = x_ref[...]

    # Layer 1: Linear + ReLU (accumulate in f32 on the MXU)
    h = jnp.dot(x, w1_ref[...], preferred_element_type=jnp.float32) + b1_ref[...]
    h = jnp.maximum(h, 0.0).astype(w2_ref.dtype)

    # Layer 2: Linear + ReLU
    h = jnp.dot(h, w2_ref[...], preferred_element_type=jnp.float32) + b2_ref[...]
    h = jnp.maximum(h, 0.0).astype(w3_ref.dtype)

    # Layer 3: Linear + ReLU
    h = jnp.dot(h, w3_ref[...], preferred_element_type=jnp.float32) + b3_ref[...]
    h = jnp.maximum(h, 0.0).astype(w4_ref.dtype)

    # Output layer: Linear (no activation), lane-dense 128-wide store
    out = jnp.dot(h, w4_ref[...], preferred_element_type=jnp.float32) + b4_ref[...]
    o_ref[...] = out.astype(o_ref.dtype)


# ---------------------------------------------------------------------------
# Parameter handling
# ---------------------------------------------------------------------------
def init_params(key, state_size, action_size, hidden=64):
    """PyTorch-Linear-like init, stored (in, out) so the kernel does x @ W + b."""
    dims = [(state_size, hidden), (hidden, hidden),
            (hidden, hidden), (hidden, action_size)]
    params = {}
    for i, (fan_in, fan_out) in enumerate(dims, start=1):
        key, kw, kb = jax.random.split(key, 3)
        bound = 1.0 / jnp.sqrt(jnp.float32(fan_in))
        params[f"w{i}"] = jax.random.uniform(
            kw, (fan_in, fan_out), jnp.float32, minval=-bound, maxval=bound)
        params[f"b{i}"] = jax.random.uniform(
            kb, (1, fan_out), jnp.float32, minval=-bound, maxval=bound)
    return params


def pad_params(params, weight_dtype=jnp.float32):
    """Zero-pad the MLP parameters into TPU-friendly tiles.

    * hidden / action (lane) dims -> multiple of 128 (full, lane-dense tiles,
      unmasked output stores).
    * state dim (K dim of layer 1 only) -> multiple of 8 (sublane) only, so the
      streamed x tiles stay narrow in HBM.
    Weights are cast to `weight_dtype` (bf16 recommended on v6e/v7x); biases
    stay f32 since they are added to the f32 accumulator.
    """
    S, H = params["w1"].shape
    A = params["w4"].shape[1]
    Sp = _round_up(S, SUBLANE)
    Hp = _round_up(H, LANE)
    Ap = _round_up(A, LANE)

    def pad_w(w, rows, cols):
        r, c = w.shape
        return jnp.zeros((rows, cols), weight_dtype).at[:r, :c].set(
            w.astype(weight_dtype))

    def pad_b(b, cols):
        b = b.reshape(1, -1)
        return jnp.zeros((1, cols), jnp.float32).at[:, :b.shape[1]].set(b)

    return {
        "w1": pad_w(params["w1"], Sp, Hp), "b1": pad_b(params["b1"], Hp),
        "w2": pad_w(params["w2"], Hp, Hp), "b2": pad_b(params["b2"], Hp),
        "w3": pad_w(params["w3"], Hp, Hp), "b3": pad_b(params["b3"], Hp),
        "w4": pad_w(params["w4"], Hp, Ap), "b4": pad_b(params["b4"], Ap),
    }


# ---------------------------------------------------------------------------
# Forward pass wrapper
# ---------------------------------------------------------------------------
def qnetwork_forward(x, padded_params, action_size, *, block_b=512):
    """x: (B, state_size) f32. Returns (B, action_size) f32."""
    B, S = x.shape
    Sp = padded_params["w1"].shape[0]   # state dim rounded to sublane multiple
    Ap = padded_params["w4"].shape[1]   # padded action dim (multiple of 128)
    wdtype = padded_params["w1"].dtype

    # Batch tile: sweep-able (512-2048 on real replay-buffer batches); clamp
    # so tiny batches still form a valid (multiple-of-8) block.
    TB = min(_round_up(block_b, SUBLANE), _round_up(B, SUBLANE))
    Bp = _round_up(B, TB)

    # Pad batch to Bp and state to Sp (padded rows/cols are inert); skip the
    # copy entirely when the input already matches.
    if (Bp, Sp) == (B, S) and x.dtype == wdtype:
        xp = x
    else:
        xp = jnp.zeros((Bp, Sp), wdtype).at[:B, :S].set(x.astype(wdtype))

    const = lambda i: (0, 0)            # weights/biases: resident, DMA'd once
    row = lambda i: (i, 0)              # x / out: tile along batch

    grid_spec = pltpu.PrefetchScalarGridSpec(
        num_scalar_prefetch=0,
        grid=(Bp // TB,),
        in_specs=[
            pl.BlockSpec((TB, Sp), row),
            pl.BlockSpec(padded_params["w1"].shape, const),
            pl.BlockSpec(padded_params["b1"].shape, const),
            pl.BlockSpec(padded_params["w2"].shape, const),
            pl.BlockSpec(padded_params["b2"].shape, const),
            pl.BlockSpec(padded_params["w3"].shape, const),
            pl.BlockSpec(padded_params["b3"].shape, const),
            pl.BlockSpec(padded_params["w4"].shape, const),
            pl.BlockSpec(padded_params["b4"].shape, const),
        ],
        out_specs=pl.BlockSpec((TB, Ap), row),
    )

    out_padded = pl.pallas_call(
        _qnet_kernel,
        out_shape=jax.ShapeDtypeStruct((Bp, Ap), jnp.float32),
        grid_spec=grid_spec,
        compiler_params=pltpu.CompilerParams(
            # batch axis is embarrassingly parallel -> shard over v7x's 2 TCs
            dimension_semantics=("parallel",),
        ),
    )(xp,
      padded_params["w1"], padded_params["b1"],
      padded_params["w2"], padded_params["b2"],
      padded_params["w3"], padded_params["b3"],
      padded_params["w4"], padded_params["b4"])

    # Slice away the batch padding and the zero-padded action columns.
    return out_padded[:B, :action_size]


def qnetwork_reference(x, params):
    """Plain-JAX reference (unpadded, f32) for correctness checks."""
    h = jnp.maximum(x @ params["w1"] + params["b1"], 0.0)
    h = jnp.maximum(h @ params["w2"] + params["b2"], 0.0)
    h = jnp.maximum(h @ params["w3"] + params["b3"], 0.0)
    return h @ params["w4"] + params["b4"]


if __name__ == "__main__":
    state_size, action_size, hidden = 8, 4, 64

    key = jax.random.PRNGKey(0)
    key, kp, kx1, kx2 = jax.random.split(key, 4)
    params = init_params(kp, state_size, action_size, hidden)

    # --- small-batch run (matches the original spec's tiny shapes), f32 ---
    batch = 2
    x_small = jax.random.normal(kx1, (batch, state_size), jnp.float32)
    padded_f32 = pad_params(params, jnp.float32)
    out_small = jax.block_until_ready(
        qnetwork_forward(x_small, padded_f32, action_size))
    ref_small = qnetwork_reference(x_small, params)
    assert out_small.shape == (batch, action_size)
    assert jnp.allclose(out_small, ref_small, atol=1e-5, rtol=1e-5)

    # --- multi-tile batch run exercising the batch grid (ragged B), f32 ---
    big_batch = 300
    x_big = jax.random.normal(kx2, (big_batch, state_size), jnp.float32)
    out_big = jax.block_until_ready(
        qnetwork_forward(x_big, padded_f32, action_size, block_b=128))
    ref_big = qnetwork_reference(x_big, params)
    assert out_big.shape == (big_batch, action_size)
    assert jnp.allclose(out_big, ref_big, atol=1e-5, rtol=1e-5)

    # --- bf16-weight path (v6e/v7x MXU-friendly), looser tolerance ---
    padded_bf16 = pad_params(params, jnp.bfloat16)
    out_bf16 = jax.block_until_ready(
        qnetwork_forward(x_big, padded_bf16, action_size, block_b=128))
    assert out_bf16.shape == (big_batch, action_size)
    assert jnp.allclose(out_bf16, ref_big, atol=5e-2, rtol=5e-2)

    print("KERNEL_OK")
</pallas_src>

<mosaic_0001>
module attributes {stable_mosaic.version = 11 : i64} {
  func.func @_qnet_kernel(%arg0: i32, %arg1: memref<8x8xf32, #tpu.memory_space<vmem>>, %arg2: memref<8x128xf32, #tpu.memory_space<vmem>>, %arg3: memref<1x128xf32, #tpu.memory_space<vmem>>, %arg4: memref<128x128xf32, #tpu.memory_space<vmem>>, %arg5: memref<1x128xf32, #tpu.memory_space<vmem>>, %arg6: memref<128x128xf32, #tpu.memory_space<vmem>>, %arg7: memref<1x128xf32, #tpu.memory_space<vmem>>, %arg8: memref<128x128xf32, #tpu.memory_space<vmem>>, %arg9: memref<1x128xf32, #tpu.memory_space<vmem>>, %arg10: memref<8x128xf32, #tpu.memory_space<vmem>>) attributes {dimension_semantics = [#tpu.dimension_semantics<parallel>], iteration_bounds = array<i64: 1>, scalar_prefetch = 0 : i64, scratch_operands = 0 : i64, tpu.core_type = #tpu.core_type<tc>, window_params = [{transform_indices = @transform_0, window_bounds = array<i64: 8, 8>}, {pipeline_mode = #tpu.pipeline_mode<synchronous>, transform_indices = @transform_1, window_bounds = array<i64: 8, 128>}, {pipeline_mode = #tpu.pipeline_mode<synchronous>, transform_indices = @transform_2, window_bounds = array<i64: 1, 128>}, {pipeline_mode = #tpu.pipeline_mode<synchronous>, transform_indices = @transform_3, window_bounds = array<i64: 128, 128>}, {pipeline_mode = #tpu.pipeline_mode<synchronous>, transform_indices = @transform_4, window_bounds = array<i64: 1, 128>}, {pipeline_mode = #tpu.pipeline_mode<synchronous>, transform_indices = @transform_5, window_bounds = array<i64: 128, 128>}, {pipeline_mode = #tpu.pipeline_mode<synchronous>, transform_indices = @transform_6, window_bounds = array<i64: 1, 128>}, {pipeline_mode = #tpu.pipeline_mode<synchronous>, transform_indices = @transform_7, window_bounds = array<i64: 128, 128>}, {pipeline_mode = #tpu.pipeline_mode<synchronous>, transform_indices = @transform_8, window_bounds = array<i64: 1, 128>}, {transform_indices = @transform_9, window_bounds = array<i64: 8, 128>}]} {
    %c0 = arith.constant 0 : index
    %c0_0 = arith.constant 0 : index
    %0 = vector.load %arg1[%c0, %c0_0] : memref<8x8xf32, #tpu.memory_space<vmem>>, vector<8x8xf32>
    %c0_1 = arith.constant 0 : index
    %c0_2 = arith.constant 0 : index
    %1 = vector.load %arg2[%c0_1, %c0_2] : memref<8x128xf32, #tpu.memory_space<vmem>>, vector<8x128xf32>
    %cst = arith.constant dense<0.000000e+00> : vector<8x128xf32>
    %2 = tpu.matmul %0, %1, %cst {dimension_numbers = #tpu.dot_dimension_numbers<[1], [0], [0], [1], [0, 0, 1, 1], [], []>} : vector<8x8xf32>, vector<8x128xf32>, vector<8x128xf32> -> vector<8x128xf32>
    %c0_3 = arith.constant 0 : index
    %c0_4 = arith.constant 0 : index
    %3 = vector.load %arg3[%c0_3, %c0_4] : memref<1x128xf32, #tpu.memory_space<vmem>>, vector<1x128xf32>
    %4 = vector.broadcast %3 : vector<1x128xf32> to vector<8x128xf32>
    %5 = arith.addf %2, %4 : vector<8x128xf32>
    %cst_5 = arith.constant 0.000000e+00 : f32
    %6 = vector.broadcast %cst_5 : f32 to vector<8x128xf32>
    %7 = arith.maximumf %5, %6 : vector<8x128xf32>
    %c0_6 = arith.constant 0 : index
    %c0_7 = arith.constant 0 : index
    %8 = vector.load %arg4[%c0_6, %c0_7] : memref<128x128xf32, #tpu.memory_space<vmem>>, vector<128x128xf32>
    %cst_8 = arith.constant dense<0.000000e+00> : vector<8x128xf32>
    %9 = tpu.matmul %7, %8, %cst_8 {dimension_numbers = #tpu.dot_dimension_numbers<[1], [0], [0], [1], [0, 0, 1, 1], [], []>} : vector<8x128xf32>, vector<128x128xf32>, vector<8x128xf32> -> vector<8x128xf32>
    %c0_9 = arith.constant 0 : index
    %c0_10 = arith.constant 0 : index
    %10 = vector.load %arg5[%c0_9, %c0_10] : memref<1x128xf32, #tpu.memory_space<vmem>>, vector<1x128xf32>
    %11 = vector.broadcast %10 : vector<1x128xf32> to vector<8x128xf32>
    %12 = arith.addf %9, %11 : vector<8x128xf32>
    %cst_11 = arith.constant 0.000000e+00 : f32
    %13 = vector.broadcast %cst_11 : f32 to vector<8x128xf32>
    %14 = arith.maximumf %12, %13 : vector<8x128xf32>
    %c0_12 = arith.constant 0 : index
    %c0_13 = arith.constant 0 : index
    %15 = vector.load %arg6[%c0_12, %c0_13] : memref<128x128xf32, #tpu.memory_space<vmem>>, vector<128x128xf32>
    %cst_14 = arith.constant dense<0.000000e+00> : vector<8x128xf32>
    %16 = tpu.matmul %14, %15, %cst_14 {dimension_numbers = #tpu.dot_dimension_numbers<[1], [0], [0], [1], [0, 0, 1, 1], [], []>} : vector<8x128xf32>, vector<128x128xf32>, vector<8x128xf32> -> vector<8x128xf32>
    %c0_15 = arith.constant 0 : index
    %c0_16 = arith.constant 0 : index
    %17 = vector.load %arg7[%c0_15, %c0_16] : memref<1x128xf32, #tpu.memory_space<vmem>>, vector<1x128xf32>
    %18 = vector.broadcast %17 : vector<1x128xf32> to vector<8x128xf32>
    %19 = arith.addf %16, %18 : vector<8x128xf32>
    %cst_17 = arith.constant 0.000000e+00 : f32
    %20 = vector.broadcast %cst_17 : f32 to vector<8x128xf32>
    %21 = arith.maximumf %19, %20 : vector<8x128xf32>
    %c0_18 = arith.constant 0 : index
    %c0_19 = arith.constant 0 : index
    %22 = vector.load %arg8[%c0_18, %c0_19] : memref<128x128xf32, #tpu.memory_space<vmem>>, vector<128x128xf32>
    %cst_20 = arith.constant dense<0.000000e+00> : vector<8x128xf32>
    %23 = tpu.matmul %21, %22, %cst_20 {dimension_numbers = #tpu.dot_dimension_numbers<[1], [0], [0], [1], [0, 0, 1, 1], [], []>} : vector<8x128xf32>, vector<128x128xf32>, vector<8x128xf32> -> vector<8x128xf32>
    %c0_21 = arith.constant 0 : index
    %c0_22 = arith.constant 0 : index
    %24 = vector.load %arg9[%c0_21, %c0_22] : memref<1x128xf32, #tpu.memory_space<vmem>>, vector<1x128xf32>
    %25 = vector.broadcast %24 : vector<1x128xf32> to vector<8x128xf32>
    %26 = arith.addf %23, %25 : vector<8x128xf32>
    %c0_23 = arith.constant 0 : index
    %c0_24 = arith.constant 0 : index
    %27 = vector.load %arg10[%c0_23, %c0_24] : memref<8x128xf32, #tpu.memory_space<vmem>>, vector<8x128xf32>
    tpu.vector_store %arg10[%c0_23, %c0_24], %26 {strides = array<i32>} : memref<8x128xf32, #tpu.memory_space<vmem>>, vector<8x128xf32>,
    return
  }
  func.func @transform_0(%arg0: i32) -> (i32, i32) {
    %c0_i32 = arith.constant 0 : i32
    %c0_i32_0 = arith.constant 0 : i32
    return %arg0, %c0_i32 : i32, i32
  }
  func.func @transform_1(%arg0: i32) -> (i32, i32) {
    %c0_i32 = arith.constant 0 : i32
    %c0_i32_0 = arith.constant 0 : i32
    %c0_i32_1 = arith.constant 0 : i32
    return %c0_i32, %c0_i32_0 : i32, i32
  }
  func.func @transform_2(%arg0: i32) -> (i32, i32) {
    %c0_i32 = arith.constant 0 : i32
    %c0_i32_0 = arith.constant 0 : i32
    %c0_i32_1 = arith.constant 0 : i32
    return %c0_i32, %c0_i32_0 : i32, i32
  }
  func.func @transform_3(%arg0: i32) -> (i32, i32) {
    %c0_i32 = arith.constant 0 : i32
    %c0_i32_0 = arith.constant 0 : i32
    %c0_i32_1 = arith.constant 0 : i32
    return %c0_i32, %c0_i32_0 : i32, i32
  }
  func.func @transform_4(%arg0: i32) -> (i32, i32) {
    %c0_i32 = arith.constant 0 : i32
    %c0_i32_0 = arith.constant 0 : i32
    %c0_i32_1 = arith.constant 0 : i32
    return %c0_i32, %c0_i32_0 : i32, i32
  }
  func.func @transform_5(%arg0: i32) -> (i32, i32) {
    %c0_i32 = arith.constant 0 : i32
    %c0_i32_0 = arith.constant 0 : i32
    %c0_i32_1 = arith.constant 0 : i32
    return %c0_i32, %c0_i32_0 : i32, i32
  }
  func.func @transform_6(%arg0: i32) -> (i32, i32) {
    %c0_i32 = arith.constant 0 : i32
    %c0_i32_0 = arith.constant 0 : i32
    %c0_i32_1 = arith.constant 0 : i32
    return %c0_i32, %c0_i32_0 : i32, i32
  }
  func.func @transform_7(%arg0: i32) -> (i32, i32) {
    %c0_i32 = arith.constant 0 : i32
    %c0_i32_0 = arith.constant 0 : i32
    %c0_i32_1 = arith.constant 0 : i32
    return %c0_i32, %c0_i32_0 : i32, i32
  }
  func.func @transform_8(%arg0: i32) -> (i32, i32) {
    %c0_i32 = arith.constant 0 : i32
    %c0_i32_0 = arith.constant 0 : i32
    %c0_i32_1 = arith.constant 0 : i32
    return %c0_i32, %c0_i32_0 : i32, i32
  }
  func.func @transform_9(%arg0: i32) -> (i32, i32) {
    %c0_i32 = arith.constant 0 : i32
    %c0_i32_0 = arith.constant 0 : i32
    return %arg0, %c0_i32 : i32, i32
  }
}

</mosaic_0001>

<llo_original>
// kernel: tpu_custom_call.1
$region0: #{tpu_custom_call.1}
  #allocation0 [shape = 'u32[]', space=smem, size = 0x4, offset = 0x4, fixed_abs, tag = 'smem constant byte address 0x4 - core index']
  #allocation1 [shape = 'u32[72,128]{1,0:T(1,128)}', space=vmem, size = 0x9000, scoped, tag = 'internal scratch']
  %s0 = inlined_call_operand.hbm [shape: f32[8,8], index: 0, kind: input, shape index: {}]
  %s1 = inlined_call_operand.hbm [shape: f32[8,128], index: 1, kind: input, shape index: {}]
  %s2 = inlined_call_operand.vmem [shape: f32[1,128], index: 2, kind: input, shape index: {}]
  %s3 = inlined_call_operand.hbm [shape: f32[128,128], index: 3, kind: input, shape index: {}]
  %s4 = inlined_call_operand.vmem [shape: f32[1,128], index: 4, kind: input, shape index: {}]
  %s5 = inlined_call_operand.hbm [shape: f32[128,128], index: 5, kind: input, shape index: {}]
  %s6 = inlined_call_operand.vmem [shape: f32[1,128], index: 6, kind: input, shape index: {}]
  %s7 = inlined_call_operand.hbm [shape: f32[128,128], index: 7, kind: input, shape index: {}]
  %s8 = inlined_call_operand.vmem [shape: f32[1,128], index: 8, kind: input, shape index: {}]
  %s9 = inlined_call_operand.hbm [shape: f32[8,128], index: 9, kind: output, shape index: {}]
  %s10 = sld [smem:[#allocation0]]
  $region66: #{tpu_custom_call.1} parent=0
    _
  %s12 = ssub.s32 1, %s10
  %s13 = scalar_select 0, %s12, %s10
  $region1: #{tpu_custom_call.1} parent=0
    #allocation2 [shape = 'u8[4096]{0}', space=vmem, size = 0x1000, scoped, tag = 'input window, operand 0, single buffered']
    #allocation3 [shape = 's32[1]{0}', space=sflag, size = 0x4, scoped, tag = 'scoped memory for tpu_custom_call.1']
    #allocation4 [shape = 's32[1]{0}', space=sflag, size = 0x4, scoped, tag = 'scoped memory for tpu_custom_call.1']
    #allocation5 [shape = 'u8[4096]{0}', space=vmem, size = 0x1000, scoped, tag = 'input window, operand 1, single buffered']
    #allocation6 [shape = 's32[1]{0}', space=sflag, size = 0x4, scoped, tag = 'scoped memory for tpu_custom_call.1']
    #allocation7 [shape = 'u8[65536]{0}', space=vmem, size = 0x10000, scoped, tag = 'input window, operand 3, single buffered']
    #allocation8 [shape = 'u8[65536]{0}', space=vmem, size = 0x10000, scoped, tag = 'input window, operand 5, single buffered']
    #allocation9 [shape = 's32[1]{0}', space=sflag, size = 0x4, scoped, tag = 'scoped memory for tpu_custom_call.1']
    #allocation10 [shape = 'u8[65536]{0}', space=vmem, size = 0x10000, scoped, tag = 'input window, operand 7, single buffered']
    #allocation11 [shape = 'u8[4096]{0}', space=vmem, size = 0x1000, scoped, tag = 'output window, operand 0, single buffered']
    %14 = vsyncpa [#allocation3], 0
    %15 = vsyncpa [#allocation6], 0
    %16 = vsyncpa [#allocation9], 0
    %17 = vsyncpa [#allocation4], 0
    // Predicated region
    $region2: #{tpu_custom_call.1} parent=1 // pred_check
      _
    $region3: #{tpu_custom_call.1} parent=1 // pred_check_branch
      %19 = sbr.rel (0) target = $region5
    $region4: #{tpu_custom_call.1} parent=1 // pred_region
      %21 = vsyncadd [#allocation3], 0
      %s23 = sshll.u32 %s0, 4
      %s24 = int_to_ptr.hbm [resolvable:$true] %s23
      %s25 = sshll.u32 [#allocation2], 4
      %s26 = int_to_ptr.vmem [resolvable:$true] %s25
      %28 = dma.hbm_to_vmem [thread:$0]  %s24, 128, %s26, [#allocation3]
    $region5: #{tpu_custom_call.1} parent=1 // pred_fallthru
      _
    // Predicated region
    $region6: #{tpu_custom_call.1} parent=1 // pred_check
      _
    $region7: #{tpu_custom_call.1} parent=1 // pred_check_branch
      %30 = sbr.rel (0) target = $region9
    $region8: #{tpu_custom_call.1} parent=1 // pred_region
      %32 = vsyncadd [#allocation6], 0
      %s34 = sshll.u32 %s1, 4
      %s35 = int_to_ptr.hbm [resolvable:$true] %s34
      %s36 = sshll.u32 [#allocation5], 4
      %s37 = int_to_ptr.vmem [resolvable:$true] %s36
      %39 = dma.hbm_to_vmem [thread:$0]  %s35, 128, %s37, [#allocation6]
    $region9: #{tpu_custom_call.1} parent=1 // pred_fallthru
      _
    // Predicated region
    $region10: #{tpu_custom_call.1} parent=1 // pred_check
      _
    $region11: #{tpu_custom_call.1} parent=1 // pred_check_branch
      %41 = sbr.rel (0) target = $region13
    $region12: #{tpu_custom_call.1} parent=1 // pred_region
      _
    $region13: #{tpu_custom_call.1} parent=1 // pred_fallthru
      _
    // Predicated region
    $region14: #{tpu_custom_call.1} parent=1 // pred_check
      _
    $region15: #{tpu_custom_call.1} parent=1 // pred_check_branch
      %43 = sbr.rel (0) target = $region17
    $region16: #{tpu_custom_call.1} parent=1 // pred_region
      %45 = vsyncadd [#allocation6], 0
      %s46 = sshll.u32 %s3, 4
      %s47 = int_to_ptr.hbm [resolvable:$true] %s46
      %s48 = sshll.u32 [#allocation7], 4
      %s49 = int_to_ptr.vmem [resolvable:$true] %s48
      %54 = dma.hbm_to_vmem [thread:$0]  %s47, 2048, %s49, [#allocation6], 128, 128, 8
    $region17: #{tpu_custom_call.1} parent=1 // pred_fallthru
      _
    // Predicated region
    $region18: #{tpu_custom_call.1} parent=1 // pred_check
      _
    $region19: #{tpu_custom_call.1} parent=1 // pred_check_branch
      %56 = sbr.rel (0) target = $region21
    $region20: #{tpu_custom_call.1} parent=1 // pred_region
      _
    $region21: #{tpu_custom_call.1} parent=1 // pred_fallthru
      _
    // Predicated region
    $region22: #{tpu_custom_call.1} parent=1 // pred_check
      _
    $region23: #{tpu_custom_call.1} parent=1 // pred_check_branch
      %58 = sbr.rel (0) target = $region25
    $region24: #{tpu_custom_call.1} parent=1 // pred_region
      %60 = vsyncadd [#allocation9], 0
      %s61 = sshll.u32 %s5, 4
      %s62 = int_to_ptr.hbm [resolvable:$true] %s61
      %s63 = sshll.u32 [#allocation8], 4
      %s64 = int_to_ptr.vmem [resolvable:$true] %s63
      %69 = dma.hbm_to_vmem [thread:$0]  %s62, 2048, %s64, [#allocation9], 128, 128, 8
    $region25: #{tpu_custom_call.1} parent=1 // pred_fallthru
      _
    // Predicated region
    $region26: #{tpu_custom_call.1} parent=1 // pred_check
      _
    $region27: #{tpu_custom_call.1} parent=1 // pred_check_branch
      %71 = sbr.rel (0) target = $region29
    $region28: #{tpu_custom_call.1} parent=1 // pred_region
      _
    $region29: #{tpu_custom_call.1} parent=1 // pred_fallthru
      _
    // Predicated region
    $region30: #{tpu_custom_call.1} parent=1 // pred_check
      _
    $region31: #{tpu_custom_call.1} parent=1 // pred_check_branch
      %73 = sbr.rel (0) target = $region33
    $region32: #{tpu_custom_call.1} parent=1 // pred_region
      %75 = vsyncadd [#allocation9], 0
      %s76 = sshll.u32 %s7, 4
      %s77 = int_to_ptr.hbm [resolvable:$true] %s76
      %s78 = sshll.u32 [#allocation10], 4
      %s79 = int_to_ptr.vmem [resolvable:$true] %s78
      %84 = dma.hbm_to_vmem [thread:$0]  %s77, 2048, %s79, [#allocation9], 128, 128, 8
    $region33: #{tpu_custom_call.1} parent=1 // pred_fallthru
      _
    // Predicated region
    $region34: #{tpu_custom_call.1} parent=1 // pred_check
      _
    $region35: #{tpu_custom_call.1} parent=1 // pred_check_branch
      %86 = sbr.rel (0) target = $region37
    $region36: #{tpu_custom_call.1} parent=1 // pred_region
      _
    $region37: #{tpu_custom_call.1} parent=1 // pred_fallthru
      _
    // Predicated region
    $region38: #{tpu_custom_call.1} parent=1 // pred_check
      _
    $region39: #{tpu_custom_call.1} parent=1 // pred_check_branch
      %88 = sbr.rel (0) target = $region41
    $region40: #{tpu_custom_call.1} parent=1 // pred_region
      %90 = dma.done [#allocation3], 128
    $region41: #{tpu_custom_call.1} parent=1 // pred_fallthru
      _
    // Predicated region
    $region42: #{tpu_custom_call.1} parent=1 // pred_check
      _
    $region43: #{tpu_custom_call.1} parent=1 // pred_check_branch
      %92 = sbr.rel (0) target = $region45
    $region44: #{tpu_custom_call.1} parent=1 // pred_region
      %94 = dma.done [#allocation6], 128
    $region45: #{tpu_custom_call.1} parent=1 // pred_fallthru
      _
    // Predicated region
    $region46: #{tpu_custom_call.1} parent=1 // pred_check
      _
    $region47: #{tpu_custom_call.1} parent=1 // pred_check_branch
      %96 = sbr.rel (0) target = $region49
    $region48: #{tpu_custom_call.1} parent=1 // pred_region
      %98 = dma.done [#allocation6], 2048
    $region49: #{tpu_custom_call.1} parent=1 // pred_fallthru
      _
    // Predicated region
    $region50: #{tpu_custom_call.1} parent=1 // pred_check
      _
    $region51: #{tpu_custom_call.1} parent=1 // pred_check_branch
      %100 = sbr.rel (0) target = $region53
    $region52: #{tpu_custom_call.1} parent=1 // pred_region
      %102 = dma.done [#allocation9], 2048
    $region53: #{tpu_custom_call.1} parent=1 // pred_fallthru
      _
    // Predicated region
    $region54: #{tpu_custom_call.1} parent=1 // pred_check
      _
    $region55: #{tpu_custom_call.1} parent=1 // pred_check_branch
      %104 = sbr.rel (0) target = $region57
    $region56: #{tpu_custom_call.1} parent=1 // pred_region
      %106 = dma.done [#allocation9], 2048
    $region57: #{tpu_custom_call.1} parent=1 // pred_fallthru
      _
    %v107 = vld [vmem:[#allocation2] sm:$0xff]
    %v108 = vld [vmem:[#allocation5] sm:$0xff]
    %v109 = vld [vmem:[%s2] sm:$0x1]
    %v111 = vperm.slane %v109, 0
    %vm113 = vcmask 64512
    %v115 = vsel %vm113, %v107, 0
    %117 = vmatpush.msra.mxu0 0.0
    %118 = vmatpush.msra.mxu0 0.0
    %119 = vmatpush.msra.mxu0 0.0
    %120 = vmatpush.msra.mxu0 0.0
    %121 = vmatpush.msra.mxu0 0.0
    %122 = vmatpush.msra.mxu0 0.0
    %123 = vmatpush.msra.mxu0 0.0
    %124 = vmatpush.msra.mxu0 0.0
    %125 = vmatpush.msra.mxu0 0.0
    %126 = vmatpush.msra.mxu0 0.0
    %127 = vmatpush.msra.mxu0 0.0
    %128 = vmatpush.msra.mxu0 0.0
    %129 = vmatpush.msra.mxu0 0.0
    %130 = vmatpush.msra.mxu0 0.0
    %131 = vmatpush.msra.mxu0 0.0
    %132 = vmatpush.msra.mxu0 %v108
    %133 = vmatmul.f32.gmra.mxu0 %v115
    %v134 = vpop.f32.mrf.mxu0
    %v135 = vadd.f32 %v111, %v134
    %136 = vdwg.mxu0
    %v137 = vmax.f32 %v135, 0.0
    %v138 = vld [vmem:[#allocation7] sm:$0xff]
    %v139 = vld [vmem:[#allocation7 + $0x8] sm:$0xff]
    %v140 = vld [vmem:[#allocation7 + $0x10] sm:$0xff]
    %v141 = vld [vmem:[#allocation7 + $0x18] sm:$0xff]
    %v142 = vld [vmem:[#allocation7 + $0x20] sm:$0xff]
    %v143 = vld [vmem:[#allocation7 + $0x28] sm:$0xff]
    %v144 = vld [vmem:[#allocation7 + $0x30] sm:$0xff]
    %v145 = vld [vmem:[#allocation7 + $0x38] sm:$0xff]
    %v146 = vld [vmem:[#allocation7 + $0x40] sm:$0xff]
    %v147 = vld [vmem:[#allocation7 + $0x48] sm:$0xff]
    %v148 = vld [vmem:[#allocation7 + $0x50] sm:$0xff]
    %v149 = vld [vmem:[#allocation7 + $0x58] sm:$0xff]
    %v150 = vld [vmem:[#allocation7 + $0x60] sm:$0xff]
    %v151 = vld [vmem:[#allocation7 + $0x68] sm:$0xff]
    %v152 = vld [vmem:[#allocation7 + $0x70] sm:$0xff]
    %v153 = vld [vmem:[#allocation7 + $0x78] sm:$0xff]
    %v154 = vld [vmem:[%s4] sm:$0x1]
    %v156 = vperm.slane %v154, 0
    %158 = vmatpush.msra.mxu0 %v153
    %159 = vmatpush.msra.mxu0 %v152
    %160 = vmatpush.msra.mxu0 %v151
    %161 = vmatpush.msra.mxu0 %v150
    %162 = vmatpush.msra.mxu0 %v149
    %163 = vmatpush.msra.mxu0 %v148
    %164 = vmatpush.msra.mxu0 %v147
    %165 = vmatpush.msra.mxu0 %v146
    %166 = vmatpush.msra.mxu0 %v145
    %167 = vmatpush.msra.mxu0 %v144
    %168 = vmatpush.msra.mxu0 %v143
    %169 = vmatpush.msra.mxu0 %v142
    %170 = vmatpush.msra.mxu0 %v141
    %171 = vmatpush.msra.mxu0 %v140
    %172 = vmatpush.msra.mxu0 %v139
    %173 = vmatpush.msra.mxu0 %v138
    %174 = vmatmul.f32.gmra.mxu0 %v137
    %v175 = vpop.f32.mrf.mxu0
    %v176 = vadd.f32 %v156, %v175
    %177 = vdwg.mxu0
    %v178 = vmax.f32 %v176, 0.0
    %v179 = vld [vmem:[#allocation8] sm:$0xff]
    %v180 = vld [vmem:[#allocation8 + $0x8] sm:$0xff]
    %v181 = vld [vmem:[#allocation8 + $0x10] sm:$0xff]
    %v182 = vld [vmem:[#allocation8 + $0x18] sm:$0xff]
    %v183 = vld [vmem:[#allocation8 + $0x20] sm:$0xff]
    %v184 = vld [vmem:[#allocation8 + $0x28] sm:$0xff]
    %v185 = vld [vmem:[#allocation8 + $0x30] sm:$0xff]
    %v186 = vld [vmem:[#allocation8 + $0x38] sm:$0xff]
    %v187 = vld [vmem:[#allocation8 + $0x40] sm:$0xff]
    %v188 = vld [vmem:[#allocation8 + $0x48] sm:$0xff]
    %v189 = vld [vmem:[#allocation8 + $0x50] sm:$0xff]
    %v190 = vld [vmem:[#allocation8 + $0x58] sm:$0xff]
    %v191 = vld [vmem:[#allocation8 + $0x60] sm:$0xff]
    %v192 = vld [vmem:[#allocation8 + $0x68] sm:$0xff]
    %v193 = vld [vmem:[#allocation8 + $0x70] sm:$0xff]
    %v194 = vld [vmem:[#allocation8 + $0x78] sm:$0xff]
    %v195 = vld [vmem:[%s6] sm:$0x1]
    %v197 = vperm.slane %v195, 0
    %199 = vmatpush.msra.mxu0 %v194
    %200 = vmatpush.msra.mxu0 %v193
    %201 = vmatpush.msra.mxu0 %v192
    %202 = vmatpush.msra.mxu0 %v191
    %203 = vmatpush.msra.mxu0 %v190
    %204 = vmatpush.msra.mxu0 %v189
    %205 = vmatpush.msra.mxu0 %v188
    %206 = vmatpush.msra.mxu0 %v187
    %207 = vmatpush.msra.mxu0 %v186
    %208 = vmatpush.msra.mxu0 %v185
    %209 = vmatpush.msra.mxu0 %v184
    %210 = vmatpush.msra.mxu0 %v183
    %211 = vmatpush.msra.mxu0 %v182
    %212 = vmatpush.msra.mxu0 %v181
    %213 = vmatpush.msra.mxu0 %v180
    %214 = vmatpush.msra.mxu0 %v179
    %215 = vmatmul.f32.gmra.mxu0 %v178
    %v216 = vpop.f32.mrf.mxu0
    %v217 = vadd.f32 %v197, %v216
    %218 = vdwg.mxu0
    %v219 = vmax.f32 %v217, 0.0
    %v220 = vld [vmem:[#allocation10] sm:$0xff]
    %v221 = vld [vmem:[#allocation10 + $0x8] sm:$0xff]
    %v222 = vld [vmem:[#allocation10 + $0x10] sm:$0xff]
    %v223 = vld [vmem:[#allocation10 + $0x18] sm:$0xff]
    %v224 = vld [vmem:[#allocation10 + $0x20] sm:$0xff]
    %v225 = vld [vmem:[#allocation10 + $0x28] sm:$0xff]
    %v226 = vld [vmem:[#allocation10 + $0x30] sm:$0xff]
    %v227 = vld [vmem:[#allocation10 + $0x38] sm:$0xff]
    %v228 = vld [vmem:[#allocation10 + $0x40] sm:$0xff]
    %v229 = vld [vmem:[#allocation10 + $0x48] sm:$0xff]
    %v230 = vld [vmem:[#allocation10 + $0x50] sm:$0xff]
    %v231 = vld [vmem:[#allocation10 + $0x58] sm:$0xff]
    %v232 = vld [vmem:[#allocation10 + $0x60] sm:$0xff]
    %v233 = vld [vmem:[#allocation10 + $0x68] sm:$0xff]
    %v234 = vld [vmem:[#allocation10 + $0x70] sm:$0xff]
    %v235 = vld [vmem:[#allocation10 + $0x78] sm:$0xff]
    %v236 = vld [vmem:[%s8] sm:$0x1]
    %v238 = vperm.slane %v236, 0
    %240 = vmatpush.msra.mxu0 %v235
    %241 = vmatpush.msra.mxu0 %v234
    %242 = vmatpush.msra.mxu0 %v233
    %243 = vmatpush.msra.mxu0 %v232
    %244 = vmatpush.msra.mxu0 %v231
    %245 = vmatpush.msra.mxu0 %v230
    %246 = vmatpush.msra.mxu0 %v229
    %247 = vmatpush.msra.mxu0 %v228
    %248 = vmatpush.msra.mxu0 %v227
    %249 = vmatpush.msra.mxu0 %v226
    %250 = vmatpush.msra.mxu0 %v225
    %251 = vmatpush.msra.mxu0 %v224
    %252 = vmatpush.msra.mxu0 %v223
    %253 = vmatpush.msra.mxu0 %v222
    %254 = vmatpush.msra.mxu0 %v221
    %255 = vmatpush.msra.mxu0 %v220
    %256 = vmatmul.f32.gmra.mxu0 %v219
    %v257 = vpop.f32.mrf.mxu0
    %v258 = vadd.f32 %v238, %v257
    %259 = vdwg.mxu0
    %260 = vst [vmem:[#allocation11] sm:$0xff] %v258
    // Predicated region
    $region58: #{tpu_custom_call.1} parent=1 // pred_check
      _
    $region59: #{tpu_custom_call.1} parent=1 // pred_check_branch
      %262 = sbr.rel (0) target = $region61
    $region60: #{tpu_custom_call.1} parent=1 // pred_region
      %264 = vsyncadd [#allocation4], 0
      %s266 = sshll.u32 [#allocation11], 4
      %s267 = int_to_ptr.vmem [resolvable:$true] %s266
      %s268 = sshll.u32 %s9, 4
      %s269 = int_to_ptr.hbm [resolvable:$true] %s268
      %271 = dma.vmem_to_hbm [thread:$0]  %s267, 128, %s269, [#allocation4]
    $region61: #{tpu_custom_call.1} parent=1 // pred_fallthru
      _
    // Predicated region
    $region62: #{tpu_custom_call.1} parent=1 // pred_check
      _
    $region63: #{tpu_custom_call.1} parent=1 // pred_check_branch
      %273 = sbr.rel (0) target = $region65
    $region64: #{tpu_custom_call.1} parent=1 // pred_region
      %275 = dma.done [#allocation4], 128
    $region65: #{tpu_custom_call.1} parent=1 // pred_fallthru
      _
    %276 = vsyncpa [#allocation3], 1
    %277 = vsyncpa [#allocation6], 1
    %278 = vsyncpa [#allocation9], 1
    %279 = vsyncpa [#allocation4], 1

</llo_original>
